<compile_context>
chip_gen: v6e
topology: v6e:2x2x1
jax: 0.10.0
libtpu: 0.0.40
codegen_flags: <defaults>
</compile_context>

<pallas_src>
import functools
import math

import jax
import jax.numpy as jnp
from jax.experimental import pallas as pl
from jax.experimental.pallas import tpu as pltpu


def layer_norm_kernel(x_ref, g_ref, b_ref, o_ref, *, eps):
    """Normalize one (block_rows, F) slab of rows.

    x_ref : (block_rows, F) VMEM, native dtype
    g_ref : (1, F)          VMEM  (a_2, broadcast over rows)
    b_ref : (1, F)          VMEM  (b_2, broadcast over rows)
    o_ref : (block_rows, F) VMEM, native dtype
    """
    x = x_ref[...].astype(jnp.float32)               # upcast on-chip only
    f = x.shape[-1]

    mean = jnp.mean(x, axis=-1, keepdims=True)       # (rows, 1)
    xc = x - mean
    # torch.Tensor.std() default is the unbiased estimator (divide by F-1).
    var = jnp.sum(xc * xc, axis=-1, keepdims=True) * (1.0 / (f - 1))
    std = jnp.sqrt(var)
    d = std + eps

    # EUP approximate reciprocal + one Newton step: error ~2^-24, VALU-free divide.
    r = pl.reciprocal(d, approx=True)
    inv = r * (2.0 - d * r)

    g = g_ref[...].astype(jnp.float32)
    b = b_ref[...].astype(jnp.float32)
    o_ref[...] = ((g * xc) * inv + b).astype(o_ref.dtype)


def _pick_block_rows(rows, feat, elem_bytes):
    """Row-tile size from a VMEM byte budget, >= 4 grid steps when possible."""
    if rows <= 8:
        return rows                                   # one tile == full extent
    # ~8 MiB of pipelined tiles: (input + output) x double-buffered = 4 tiles.
    budget = 8 * 1024 * 1024
    per_row = 4 * feat * elem_bytes
    cap = max(8, min(2048, (budget // per_row) // 8 * 8))
    # Aim for >= 4 grid steps (2 per TensorCore on v7x for DMA/compute overlap).
    target = max(8, ((-(-rows // 4)) + 7) // 8 * 8)
    full = ((rows + 7) // 8) * 8
    return max(8, min(cap, target, full))


def layer_norm_forward(x, a_2, b_2, *, eps=1e-6, block_rows=None):
    """LayerNorm over the last dim of x (any leading shape). Preserves dtype."""
    orig_shape = x.shape
    feat = orig_shape[-1]
    assert feat > 1, "unbiased std needs at least 2 features"
    # Lane-dense stores need F % 128 == 0 for peak throughput; still correct
    # otherwise (block covers the full feature dim).
    rows = math.prod(orig_shape[:-1]) if len(orig_shape) > 1 else 1
    xf = x.reshape(rows, feat)                        # view-like, no dtype cast

    elem_bytes = jnp.dtype(x.dtype).itemsize
    if block_rows is None:
        block_rows = _pick_block_rows(rows, feat, elem_bytes)

    grid = (pl.cdiv(rows, block_rows),)               # partial last block is OK

    out = pl.pallas_call(
        functools.partial(layer_norm_kernel, eps=eps),
        out_shape=jax.ShapeDtypeStruct((rows, feat), x.dtype),
        grid=grid,
        in_specs=[
            pl.BlockSpec((block_rows, feat), lambda i: (i, 0)),   # x rows tile
            pl.BlockSpec((1, feat), lambda i: (0, 0)),            # a_2 (resident)
            pl.BlockSpec((1, feat), lambda i: (0, 0)),            # b_2 (resident)
        ],
        out_specs=pl.BlockSpec((block_rows, feat), lambda i: (i, 0)),
        compiler_params=pltpu.CompilerParams(
            dimension_semantics=("parallel",),
            vmem_limit_bytes=32 * 1024 * 1024),
        cost_estimate=pl.CostEstimate(
            flops=7 * rows * feat,
            transcendentals=rows,
            bytes_accessed=2 * rows * feat * elem_bytes + 2 * feat * 4),
    )(xf, a_2.reshape(1, feat), b_2.reshape(1, feat))

    return out.reshape(orig_shape)


def reference_forward(x, a_2, b_2, *, eps=1e-6):
    """Pure-JAX mirror of the PyTorch forward for verification (f32)."""
    x = x.astype(jnp.float32)
    mean = x.mean(-1, keepdims=True)
    std = jnp.std(x, axis=-1, ddof=1, keepdims=True)   # torch unbiased std
    return a_2.astype(jnp.float32) * (x - mean) / (std + eps) + b_2.astype(jnp.float32)


if __name__ == "__main__":
    B, S, F = 2, 16, 512      # batch, sequence, hidden (lane-dense last dim)

    key = jax.random.PRNGKey(0)
    k1, k2, k3 = jax.random.split(key, 3)

    x = jax.random.normal(k1, (B, S, F), jnp.float32)
    # Module inits a_2=ones, b_2=zeros; perturb so the affine path is exercised.
    a_2 = 1.0 + 0.1 * jax.random.normal(k2, (F,), jnp.float32)
    b_2 = 0.1 * jax.random.normal(k3, (F,), jnp.float32)

    # f32 path: tight tolerance, dtype preserved.
    out = layer_norm_forward(x, a_2, b_2, eps=1e-6)
    out = jax.block_until_ready(out)
    ref = reference_forward(x, a_2, b_2, eps=1e-6)
    assert out.shape == x.shape, out.shape
    assert out.dtype == x.dtype, out.dtype
    assert jnp.allclose(out, ref, atol=1e-4, rtol=1e-4), \
        float(jnp.max(jnp.abs(out - ref)))

    # bf16 path: native-dtype HBM I/O (half the traffic), f32 compute on-chip.
    x_bf16 = x.astype(jnp.bfloat16)
    out_bf16 = jax.block_until_ready(layer_norm_forward(x_bf16, a_2, b_2, eps=1e-6))
    assert out_bf16.dtype == jnp.bfloat16, out_bf16.dtype
    ref_bf16 = reference_forward(x_bf16, a_2, b_2, eps=1e-6)
    assert jnp.allclose(out_bf16.astype(jnp.float32), ref_bf16, atol=5e-2), \
        float(jnp.max(jnp.abs(out_bf16.astype(jnp.float32) - ref_bf16)))

    print("KERNEL_OK")
</pallas_src>

<mosaic_0001>
module attributes {stable_mosaic.version = 11 : i64} {
  func.func @layer_norm_kernel(%arg0: i32, %arg1: memref<8x512xf32, #tpu.memory_space<vmem>>, %arg2: memref<1x512xf32, #tpu.memory_space<vmem>>, %arg3: memref<1x512xf32, #tpu.memory_space<vmem>>, %arg4: memref<8x512xf32, #tpu.memory_space<vmem>>) attributes {dimension_semantics = [#tpu.dimension_semantics<parallel>], iteration_bounds = array<i64: 4>, scalar_prefetch = 0 : i64, scratch_operands = 0 : i64, tpu.core_type = #tpu.core_type<tc>, window_params = [{transform_indices = @transform_0, window_bounds = array<i64: 8, 512>}, {pipeline_mode = #tpu.pipeline_mode<synchronous>, transform_indices = @transform_1, window_bounds = array<i64: 1, 512>}, {pipeline_mode = #tpu.pipeline_mode<synchronous>, transform_indices = @transform_2, window_bounds = array<i64: 1, 512>}, {transform_indices = @transform_3, window_bounds = array<i64: 8, 512>}]} {
    %c0 = arith.constant 0 : index
    %c0_0 = arith.constant 0 : index
    %0 = vector.load %arg1[%c0, %c0_0] : memref<8x512xf32, #tpu.memory_space<vmem>>, vector<8x512xf32>
    %cst = arith.constant dense<0.000000e+00> : vector<8xf32>
    %1 = vector.multi_reduction <add>, %0, %cst [1] : vector<8x512xf32> to vector<8xf32>
    %2 = vector.shape_cast %1 : vector<8xf32> to vector<8x1xf32>
    %cst_1 = arith.constant 5.120000e+02 : f32
    %3 = vector.broadcast %cst_1 : f32 to vector<8x1xf32>
    %4 = arith.divf %2, %3 : vector<8x1xf32>
    %5 = vector.broadcast %4 : vector<8x1xf32> to vector<8x512xf32>
    %6 = arith.subf %0, %5 : vector<8x512xf32>
    %7 = arith.mulf %6, %6 : vector<8x512xf32>
    %cst_2 = arith.constant dense<0.000000e+00> : vector<8xf32>
    %8 = vector.multi_reduction <add>, %7, %cst_2 [1] : vector<8x512xf32> to vector<8xf32>
    %9 = vector.shape_cast %8 : vector<8xf32> to vector<8x1xf32>
    %cst_3 = arith.constant 0.00195694715 : f32
    %10 = vector.broadcast %cst_3 : f32 to vector<8x1xf32>
    %11 = arith.mulf %9, %10 : vector<8x1xf32>
    %12 = math.sqrt %11 : vector<8x1xf32>
    %cst_4 = arith.constant 9.99999997E-7 : f32
    %13 = vector.broadcast %cst_4 : f32 to vector<8x1xf32>
    %14 = arith.addf %12, %13 : vector<8x1xf32>
    %15 = tpu.reciprocal %14 {approx = true} : vector<8x1xf32> -> vector<8x1xf32>
    %16 = arith.mulf %14, %15 : vector<8x1xf32>
    %cst_5 = arith.constant 2.000000e+00 : f32
    %17 = vector.broadcast %cst_5 : f32 to vector<8x1xf32>
    %18 = arith.subf %17, %16 : vector<8x1xf32>
    %19 = arith.mulf %15, %18 : vector<8x1xf32>
    %c0_6 = arith.constant 0 : index
    %c0_7 = arith.constant 0 : index
    %20 = vector.load %arg2[%c0_6, %c0_7] : memref<1x512xf32, #tpu.memory_space<vmem>>, vector<1x512xf32>
    %c0_8 = arith.constant 0 : index
    %c0_9 = arith.constant 0 : index
    %21 = vector.load %arg3[%c0_8, %c0_9] : memref<1x512xf32, #tpu.memory_space<vmem>>, vector<1x512xf32>
    %22 = vector.broadcast %20 : vector<1x512xf32> to vector<8x512xf32>
    %23 = arith.mulf %22, %6 : vector<8x512xf32>
    %24 = vector.broadcast %19 : vector<8x1xf32> to vector<8x512xf32>
    %25 = arith.mulf %23, %24 : vector<8x512xf32>
    %26 = vector.broadcast %21 : vector<1x512xf32> to vector<8x512xf32>
    %27 = arith.addf %25, %26 : vector<8x512xf32>
    %c0_10 = arith.constant 0 : index
    %c0_11 = arith.constant 0 : index
    %28 = vector.load %arg4[%c0_10, %c0_11] : memref<8x512xf32, #tpu.memory_space<vmem>>, vector<8x512xf32>
    tpu.vector_store %arg4[%c0_10, %c0_11], %27 {strides = array<i32>} : memref<8x512xf32, #tpu.memory_space<vmem>>, vector<8x512xf32>,
    return
  }
  func.func @transform_0(%arg0: i32) -> (i32, i32) {
    %c0_i32 = arith.constant 0 : i32
    %c0_i32_0 = arith.constant 0 : i32
    return %arg0, %c0_i32 : i32, i32
  }
  func.func @transform_1(%arg0: i32) -> (i32, i32) {
    %c0_i32 = arith.constant 0 : i32
    %c0_i32_0 = arith.constant 0 : i32
    %c0_i32_1 = arith.constant 0 : i32
    return %c0_i32, %c0_i32_0 : i32, i32
  }
  func.func @transform_2(%arg0: i32) -> (i32, i32) {
    %c0_i32 = arith.constant 0 : i32
    %c0_i32_0 = arith.constant 0 : i32
    %c0_i32_1 = arith.constant 0 : i32
    return %c0_i32, %c0_i32_0 : i32, i32
  }
  func.func @transform_3(%arg0: i32) -> (i32, i32) {
    %c0_i32 = arith.constant 0 : i32
    %c0_i32_0 = arith.constant 0 : i32
    return %arg0, %c0_i32 : i32, i32
  }
}

</mosaic_0001>

<llo_original>
// kernel: tpu_custom_call.1
$region0: #{tpu_custom_call.1}
  #allocation0 [shape = 'u32[]', space=smem, size = 0x4, offset = 0x4, fixed_abs, tag = 'smem constant byte address 0x4 - core index']
  #allocation1 [shape = 'u32[144,128]{1,0:T(1,128)}', space=vmem, size = 0x12000, scoped, tag = 'internal scratch']
  %s0 = inlined_call_operand.hbm [shape: f32[32,512], index: 0, kind: input, shape index: {}]
  %s1 = inlined_call_operand.hbm [shape: f32[1,512], index: 1, kind: input, shape index: {}]
  %s2 = inlined_call_operand.hbm [shape: f32[1,512], index: 2, kind: input, shape index: {}]
  %s3 = inlined_call_operand.hbm [shape: f32[32,512], index: 3, kind: output, shape index: {}]
  %s4 = sld [smem:[#allocation0]]
  $region57: #{tpu_custom_call.1} parent=0
    _
  %s6 = ssub.s32 1, %s4
  %s7 = scalar_select 0, %s6, %s4
  $region1: #{tpu_custom_call.1} parent=0
    #allocation2 [shape = 'u8[32768]{0}', space=vmem, size = 0x8000, scoped, tag = 'input window, operand 0']
    #allocation3 [shape = 's32[2]{0}', space=sflag, size = 0x8, scoped, tag = 'scoped memory for tpu_custom_call.1']
    #allocation4 [shape = 's32[2]{0}', space=sflag, size = 0x8, scoped, tag = 'scoped memory for tpu_custom_call.1']
    #allocation5 [shape = 'u8[2048]{0}', space=vmem, size = 0x800, scoped, tag = 'input window, operand 1, single buffered']
    #allocation6 [shape = 's32[1]{0}', space=sflag, size = 0x4, scoped, tag = 'scoped memory for tpu_custom_call.1']
    #allocation7 [shape = 'u8[2048]{0}', space=vmem, size = 0x800, scoped, tag = 'input window, operand 2, single buffered']
    #allocation8 [shape = 'u8[32768]{0}', space=vmem, size = 0x8000, scoped, tag = 'output window, operand 0']
    %8 = vsyncpa [#allocation3], 0
    %s9 = scalar_lea.sflag [#allocation3], 1
    %10 = vsyncpa %s9, 0
    %11 = vsyncpa [#allocation6], 0
    %12 = vsyncpa [#allocation4], 0
    %s13 = scalar_lea.sflag [#allocation4], 1
    %14 = vsyncpa %s13, 0
    loop: start=0, step=1, limit=6
    $region2: #{tpu_custom_call.1} parent=1 // loop_pre_header
      _
    $region3: #{tpu_custom_call.1} parent=1 // loop_header
      %s16 = sphi 0, %s20
      %p17 = scmp.ge.s32.totalorder %s16, 6
      %s26 = sphi 0, %s28
      %s29 = sphi 0, %s26
      %s30 = sphi 0, %s29
      %s46 = sphi 0, %s30
      %s50 = sphi 0, %s50
      %s52 = sphi 0, %s50
      %s53 = sphi 0, %s52
      %s67 = sphi 0, %s53
      %s71 = sphi 0, %s71
      %s73 = sphi 0, %s71
      %s74 = sphi 0, %s73
      %s88 = sphi 0, %s74
      %s94 = sphi 0, %s96
      %s97 = sphi 0, %s94
      %s98 = sphi 0, %s97
      %s114 = sphi 0, %s98
    $region4: #{tpu_custom_call.1} parent=1 // loop_header_branch
      %19 = sbr.rel (%p17) target = $region8
    $region5: #{tpu_custom_call.1} parent=1 // loop_body
      %s21 = ssub.s32 %s16, 1
      %s22 = ssub.s32 %s16, 2
      %s23 = sadd.s32 %s16, 1
      %s24 = ssub.s32 %s16, %s23
      %p25 = scmp.eq.s32.totalorder %s24, 0
      %s27 = sadd.s32 %s26, 1
      %s28 = scalar_select %p25, %s26, %s27
      %p31 = pneg %p25
      %p32 = scmp.eq.s32.totalorder %s16, 3
      %p33 = por %p31, %p32
      %p34 = scmp.ne.s32.totalorder %s26, %s29
      %p35 = scmp.eq.s32.totalorder %s16, 0
      %p36 = por %p34, %p35
      %p37 = scmp.ne.s32.totalorder %s26, %s29
      %p38 = scmp.eq.s32.totalorder %s21, 3
      %p39 = por %p37, %p38
      %p40 = scmp.ne.s32.totalorder %s29, %s30
      %p41 = scmp.eq.s32.totalorder %s21, 0
      %p42 = por %p40, %p41
      %p43 = scmp.ne.s32.totalorder %s29, %s30
      %p44 = scmp.eq.s32.totalorder %s22, 3
      %p45 = por %p43, %p44
      %p47 = scmp.ne.s32.totalorder %s30, %s46
      %p48 = scmp.eq.s32.totalorder %s22, 0
      %p49 = por %p47, %p48
      %s51 = sadd.s32 %s50, 1
      %p54 = scmp.eq.s32.totalorder %s16, 3
      %p55 = scmp.ne.s32.totalorder %s50, %s52
      %p56 = scmp.eq.s32.totalorder %s16, 0
      %p57 = por %p55, %p56
      %p58 = scmp.ne.s32.totalorder %s50, %s52
      %p59 = scmp.eq.s32.totalorder %s21, 3
      %p60 = por %p58, %p59
      %p61 = scmp.ne.s32.totalorder %s52, %s53
      %p62 = scmp.eq.s32.totalorder %s21, 0
      %p63 = por %p61, %p62
      %p64 = scmp.ne.s32.totalorder %s52, %s53
      %p65 = scmp.eq.s32.totalorder %s22, 3
      %p66 = por %p64, %p65
      %p68 = scmp.ne.s32.totalorder %s53, %s67
      %p69 = scmp.eq.s32.totalorder %s22, 0
      %p70 = por %p68, %p69
      %s72 = sadd.s32 %s71, 1
      %p75 = scmp.eq.s32.totalorder %s16, 3
      %p76 = scmp.ne.s32.totalorder %s71, %s73
      %p77 = scmp.eq.s32.totalorder %s16, 0
      %p78 = por %p76, %p77
      %p79 = scmp.ne.s32.totalorder %s71, %s73
      %p80 = scmp.eq.s32.totalorder %s21, 3
      %p81 = por %p79, %p80
      %p82 = scmp.ne.s32.totalorder %s73, %s74
      %p83 = scmp.eq.s32.totalorder %s21, 0
      %p84 = por %p82, %p83
      %p85 = scmp.ne.s32.totalorder %s73, %s74
      %p86 = scmp.eq.s32.totalorder %s22, 3
      %p87 = por %p85, %p86
      %p89 = scmp.ne.s32.totalorder %s74, %s88
      %p90 = scmp.eq.s32.totalorder %s22, 0
      %p91 = por %p89, %p90
      %s92 = ssub.s32 %s16, %s23
      %p93 = scmp.eq.s32.totalorder %s92, 0
      %s95 = sadd.s32 %s94, 1
      %s96 = scalar_select %p93, %s94, %s95
      %p99 = pneg %p93
      %p100 = scmp.eq.s32.totalorder %s16, 3
      %p101 = por %p99, %p100
      %p102 = scmp.ne.s32.totalorder %s94, %s97
      %p103 = scmp.eq.s32.totalorder %s16, 0
      %p104 = por %p102, %p103
      %p105 = scmp.ne.s32.totalorder %s94, %s97
      %p106 = scmp.eq.s32.totalorder %s21, 3
      %p107 = por %p105, %p106
      %p108 = scmp.ne.s32.totalorder %s97, %s98
      %p109 = scmp.eq.s32.totalorder %s21, 0
      %p110 = por %p108, %p109
      %p111 = scmp.ne.s32.totalorder %s97, %s98
      %p112 = scmp.eq.s32.totalorder %s22, 3
      %p113 = por %p111, %p112
      %p115 = scmp.ne.s32.totalorder %s98, %s114
      %p116 = scmp.eq.s32.totalorder %s22, 0
      %p117 = por %p115, %p116
      %p118 = scmp.le.s32.totalorder 1, %s16
      %p119 = scmp.lt.s32.totalorder %s16, 5
      %p120 = pnand %p118, %p119
      %p121 = pneg %p120
      // Predicated region
      $region9: #{tpu_custom_call.1} parent=5 // pred_check
        _
      $region10: #{tpu_custom_call.1} parent=5 // pred_check_branch
        %123 = sbr.rel (%p120) target = $region12
      $region11: #{tpu_custom_call.1} parent=5 // pred_region
        %s124 = ssub.s32 %s16, 1
        // Predicated region
        $region13: #{tpu_custom_call.1} parent=11 // pred_check
          %p125 = pneg %p63
        $region14: #{tpu_custom_call.1} parent=11 // pred_check_branch
          %127 = sbr.rel (%p125) target = $region16
        $region15: #{tpu_custom_call.1} parent=11 // pred_region
          %s129 = ssub.s32 64, 64
          %130 = vsyncadd [#allocation6], %s129
          %s132 = sshll.u32 [#allocation5], 4
          %s133 = int_to_ptr.vmem [resolvable:$true] %s132
          %135 = dma.hbm_to_vmem [thread:$0]  %s1, 64, %s133, [#allocation6]
        $region16: #{tpu_custom_call.1} parent=11 // pred_fallthru
          _
        // Predicated region
        $region17: #{tpu_custom_call.1} parent=11 // pred_check
          %p136 = pneg %p84
        $region18: #{tpu_custom_call.1} parent=11 // pred_check_branch
          %138 = sbr.rel (%p136) target = $region20
        $region19: #{tpu_custom_call.1} parent=11 // pred_region
          %s140 = ssub.s32 64, 64
          %141 = vsyncadd [#allocation6], %s140
          %s143 = sshll.u32 [#allocation7], 4
          %s144 = int_to_ptr.vmem [resolvable:$true] %s143
          %146 = dma.hbm_to_vmem [thread:$0]  %s2, 64, %s144, [#allocation6]
        $region20: #{tpu_custom_call.1} parent=11 // pred_fallthru
          _
      $region12: #{tpu_custom_call.1} parent=5 // pred_fallthru
        _
      %p147 = scmp.lt.s32.totalorder %s16, 4
      // Predicated region
      $region21: #{tpu_custom_call.1} parent=5 // pred_check
        %p148 = pneg %p147
      $region22: #{tpu_custom_call.1} parent=5 // pred_check_branch
        %150 = sbr.rel (%p148) target = $region24
      $region23: #{tpu_custom_call.1} parent=5 // pred_region
        // Predicated region
        $region25: #{tpu_custom_call.1} parent=23 // pred_check
          %p151 = pneg %p36
        $region26: #{tpu_custom_call.1} parent=23 // pred_check_branch
          %153 = sbr.rel (%p151) target = $region28
        $region27: #{tpu_custom_call.1} parent=23 // pred_region
          %s154 = sand.u32 %s26, 1
          %s155 = scalar_lea.sflag [#allocation3], %s154
          %s156 = sand.u32 %s26, 1
          %s157 = smul.addr %s156, 32
          %s158 = scalar_lea.vmem [#allocation2], %s157
          %s160 = ssub.s32 512, 512
          %161 = vsyncadd %s155, %s160
          %s162 = smul.addr %s16, 4
          %s163 = smul.addr %s162, 128
          %s164 = scalar_lea.hbm %s0, %s163
          %s166 = sshll.u32 %s158, 4
          %s167 = int_to_ptr.vmem [resolvable:$true] %s166
          %169 = dma.hbm_to_vmem [thread:$0]  %s164, 512, %s167, %s155
        $region28: #{tpu_custom_call.1} parent=23 // pred_fallthru
          _
      $region24: #{tpu_custom_call.1} parent=5 // pred_fallthru
        _
      %p170 = scmp.le.s32.totalorder 1, %s16
      %p171 = scmp.lt.s32.totalorder %s16, 5
      %p172 = pnand %p170, %p171
      %p173 = pneg %p172
      // Predicated region
      $region29: #{tpu_custom_call.1} parent=5 // pred_check
        _
      $region30: #{tpu_custom_call.1} parent=5 // pred_check_branch
        %175 = sbr.rel (%p172) target = $region32
      $region31: #{tpu_custom_call.1} parent=5 // pred_region
        %s176 = ssub.s32 %s16, 1
        %s177 = sand.u32 %s29, 1
        %s178 = scalar_lea.sflag [#allocation3], %s177
        %s179 = sand.u32 %s29, 1
        %s180 = smul.addr %s179, 32
        %s181 = scalar_lea.vmem [#allocation2], %s180
        // Predicated region
        $region33: #{tpu_custom_call.1} parent=31 // pred_check
          %p182 = pneg %p42
        $region34: #{tpu_custom_call.1} parent=31 // pred_check_branch
          %184 = sbr.rel (%p182) target = $region36
        $region35: #{tpu_custom_call.1} parent=31 // pred_region
          %185 = dma.done %s178, 512
        $region36: #{tpu_custom_call.1} parent=31 // pred_fallthru
          _
        // Predicated region
        $region37: #{tpu_custom_call.1} parent=31 // pred_check
          %p186 = pneg %p63
        $region38: #{tpu_custom_call.1} parent=31 // pred_check_branch
          %188 = sbr.rel (%p186) target = $region40
        $region39: #{tpu_custom_call.1} parent=31 // pred_region
          %189 = dma.done [#allocation6], 64
        $region40: #{tpu_custom_call.1} parent=31 // pred_fallthru
          _
        // Predicated region
        $region41: #{tpu_custom_call.1} parent=31 // pred_check
          %p190 = pneg %p84
        $region42: #{tpu_custom_call.1} parent=31 // pred_check_branch
          %192 = sbr.rel (%p190) target = $region44
        $region43: #{tpu_custom_call.1} parent=31 // pred_region
          %193 = dma.done [#allocation6], 64
        $region44: #{tpu_custom_call.1} parent=31 // pred_fallthru
          _
        %s194 = sand.u32 %s29, 1
        %s195 = scalar_lea.sflag [#allocation3], %s194
        %s196 = sand.u32 %s29, 1
        %s197 = smul.addr %s196, 32
        %s198 = scalar_lea.vmem [#allocation2], %s197
        %p199 = pneg %p42
        %p200 = pneg %p39
        %p201 = pneg %p63
        %p202 = pneg %p60
        %p203 = pneg %p84
        %p204 = pneg %p81
        %p205 = pneg %p110
        %p206 = pneg %p107
        %s207 = sand.u32 %s97, 1
        %s208 = scalar_lea.sflag [#allocation4], %s207
        %s209 = sand.u32 %s97, 1
        %s210 = smul.addr %s209, 32
        %s211 = scalar_lea.vmem [#allocation8], %s210
        %v212 = vld [vmem:[%s181] sm:$0xff]
        %v213 = vld [vmem:[%s181 + $0x8] sm:$0xff]
        %v214 = vld [vmem:[%s181 + $0x10] sm:$0xff]
        %v215 = vld [vmem:[%s181 + $0x18] sm:$0xff]
        %v216 = vadd.f32 %v212, %v213
        %v217 = vadd.f32 %v216, %v214
        %v218 = vadd.f32 %v217, %v215
        %219 = vadd.xlane.f32.xlu0 %v218
        %v220 = vpop.xlane.xlu0 %219
        %v221 = vrcp.pop 512.0
        %v222 = vmul.f32 %v220, %v221
        %v223 = vsub.f32 %v212, %v222
        %v224 = vsub.f32 %v213, %v222
        %v225 = vsub.f32 %v214, %v222
        %v226 = vsub.f32 %v215, %v222
        %v227 = vmul.f32 %v223, %v223
        %v228 = vmul.f32 %v224, %v224
        %v229 = vmul.f32 %v225, %v225
        %v230 = vmul.f32 %v226, %v226
        %v231 = vadd.f32 %v227, %v228
        %v232 = vadd.f32 %v231, %v229
        %v233 = vadd.f32 %v232, %v230
        %234 = vadd.xlane.f32.xlu0 %v233
        %v235 = vpop.xlane.xlu0 %234
        %v236 = vmul.f32 %v235, 0.0019569471
        %v237 = vrsqrt.pop %v236
        %v238 = vmul.f32 %v236, %v237
        %vm239 = vcmp.eq.f32.partialorder %v236, inf
        %v240 = vsel %vm239, %v236, %v238
        %vm241 = vcmp.eq.f32.partialorder %v236, 0.0
        %v242 = vand.u32 %v236, 2147483648
        %v243 = vsel %vm241, %v242, %v240
        %v244 = vadd.f32 %v243, 1e-06
        %v245 = vrcp.pop %v244
        %v246 = vmul.f32 %v244, %v245
        %v247 = vsub.f32 2.0, %v246
        %v248 = vmul.f32 %v245, %v247
        %v249 = vld [vmem:[#allocation5] sm:$0xf]
        %v250 = vld [vmem:[#allocation7] sm:$0xf]
        %v252 = vlaneseq
        %v253 = vshrl.u32 %v252, 7
        %v254 = vsub.s32 0, %v253
        %v255 = vrot.slane %v249, %v254
        %v256 = vlaneseq
        %v257 = vshrl.u32 %v256, 7
        %v258 = vsub.s32 1, %v257
        %v259 = vrot.slane %v249, %v258
        %v260 = vlaneseq
        %v261 = vshrl.u32 %v260, 7
        %v262 = vsub.s32 2, %v261
        %v263 = vrot.slane %v249, %v262
        %v264 = vlaneseq
        %v265 = vshrl.u32 %v264, 7
        %v266 = vsub.s32 3, %v265
        %v267 = vrot.slane %v249, %v266
        %v272 = vmul.f32 %v255, %v223
        %v273 = vmul.f32 %v259, %v224
        %v274 = vmul.f32 %v263, %v225
        %v275 = vmul.f32 %v267, %v226
        %v276 = vmul.f32 %v272, %v248
        %v277 = vmul.f32 %v273, %v248
        %v278 = vmul.f32 %v274, %v248
        %v279 = vmul.f32 %v275, %v248
        %v281 = vlaneseq
        %v282 = vshrl.u32 %v281, 7
        %v283 = vsub.s32 0, %v282
        %v284 = vrot.slane %v250, %v283
        %v285 = vlaneseq
        %v286 = vshrl.u32 %v285, 7
        %v287 = vsub.s32 1, %v286
        %v288 = vrot.slane %v250, %v287
        %v289 = vlaneseq
        %v290 = vshrl.u32 %v289, 7
        %v291 = vsub.s32 2, %v290
        %v292 = vrot.slane %v250, %v291
        %v293 = vlaneseq
        %v294 = vshrl.u32 %v293, 7
        %v295 = vsub.s32 3, %v294
        %v296 = vrot.slane %v250, %v295
        %v301 = vadd.f32 %v276, %v284
        %v302 = vadd.f32 %v277, %v288
        %v303 = vadd.f32 %v278, %v292
        %v304 = vadd.f32 %v279, %v296
        %305 = vst [vmem:[%s211] sm:$0xff] %v301
        %306 = vst [vmem:[%s211 + $0x8] sm:$0xff] %v302
        %307 = vst [vmem:[%s211 + $0x10] sm:$0xff] %v303
        %308 = vst [vmem:[%s211 + $0x18] sm:$0xff] %v304
        %s309 = sand.u32 %s97, 1
        %s310 = scalar_lea.sflag [#allocation4], %s309
        %s311 = sand.u32 %s97, 1
        %s312 = smul.addr %s311, 32
        %s313 = scalar_lea.vmem [#allocation8], %s312
        // Predicated region
        $region45: #{tpu_custom_call.1} parent=31 // pred_check
          %p314 = pneg %p107
        $region46: #{tpu_custom_call.1} parent=31 // pred_check_branch
          %316 = sbr.rel (%p314) target = $region48
        $region47: #{tpu_custom_call.1} parent=31 // pred_region
          %s318 = ssub.s32 512, 512
          %319 = vsyncadd %s310, %s318
          %s320 = smul.addr %s21, 4
          %s321 = smul.addr %s320, 128
          %s322 = scalar_lea.hbm %s3, %s321
          %s324 = sshll.u32 %s313, 4
          %s325 = int_to_ptr.vmem [resolvable:$true] %s324
          %327 = dma.vmem_to_hbm [thread:$0]  %s325, 512, %s322, %s310
        $region48: #{tpu_custom_call.1} parent=31 // pred_fallthru
          _
      $region32: #{tpu_custom_call.1} parent=5 // pred_fallthru
        _
      %p328 = scmp.le.s32.totalorder 2, %s16
      // Predicated region
      $region49: #{tpu_custom_call.1} parent=5 // pred_check
        %p329 = pneg %p328
      $region50: #{tpu_custom_call.1} parent=5 // pred_check_branch
        %331 = sbr.rel (%p329) target = $region52
      $region51: #{tpu_custom_call.1} parent=5 // pred_region
        %s332 = ssub.s32 %s16, 2
        // Predicated region
        $region53: #{tpu_custom_call.1} parent=51 // pred_check
          %p333 = pneg %p113
        $region54: #{tpu_custom_call.1} parent=51 // pred_check_branch
          %335 = sbr.rel (%p333) target = $region56
        $region55: #{tpu_custom_call.1} parent=51 // pred_region
          %s336 = sand.u32 %s98, 1
          %s337 = scalar_lea.sflag [#allocation4], %s336
          %s338 = sand.u32 %s98, 1
          %s339 = smul.addr %s338, 32
          %s340 = scalar_lea.vmem [#allocation8], %s339
          %341 = dma.done %s337, 512
        $region56: #{tpu_custom_call.1} parent=51 // pred_fallthru
          _
      $region52: #{tpu_custom_call.1} parent=5 // pred_fallthru
        _
    $region6: #{tpu_custom_call.1} parent=1 // loop_footer
      %s20 = sadd.s32 1, %s16
    $region7: #{tpu_custom_call.1} parent=1 // loop_footer_branch
      %15 = sbr.rel target = $region3
    $region8: #{tpu_custom_call.1} parent=1 // loop_exit
      _
    %342 = vsyncpa [#allocation3], 1
    %s343 = scalar_lea.sflag [#allocation3], 1
    %344 = vsyncpa %s343, 1
    %345 = vsyncpa [#allocation6], 1
    %346 = vsyncpa [#allocation4], 1
    %s347 = scalar_lea.sflag [#allocation4], 1
    %348 = vsyncpa %s347, 1

</llo_original>
